<compile_context>
chip_gen: v6e
topology: v6e:2x2x1
jax: 0.10.0
libtpu: 0.0.40
codegen_flags: <defaults>
</compile_context>

<pallas_src>
import functools

import jax
import jax.numpy as jnp
from jax.experimental import pallas as pl
from jax.experimental.pallas import tpu as pltpu


def _cdiv(a, b):
    return -(-a // b)


def _round_up(x, m):
    return _cdiv(x, m) * m


def _patch_embed_matmul_kernel(x_ref, w_ref, b_ref, o_ref):
    # x_ref: (TM, K) bf16 patch rows (streamed over the M grid)
    # w_ref: (K, N)  bf16 flattened conv weight (resident)
    # b_ref: (1, N)  f32 bias (resident)
    # o_ref: (TM, N) bf16 output tile
    acc = jnp.dot(x_ref[...], w_ref[...], preferred_element_type=jnp.float32)
    o_ref[...] = (acc + b_ref[...]).astype(o_ref.dtype)


def _pick_tiles(m, k, n, *, budget_bytes=16 * 1024 * 1024, tm_cap=2048):
    """Choose (TM, n_tiles, padded_M).

    The budget counts the double-buffered streamed in/out tiles, the resident
    weight/bias *double-buffered* (Pallas allocates 2 buffers even for a
    constant index_map) and the f32 matmul accumulator temp.  Always >= 2 tiles
    (and an even count) so the pipeline has something to overlap and v7x
    megacore can split the 'parallel' axis; tiles are near-equal so the padding
    waste is < 8 rows per tile instead of up to TM-1 rows."""
    mp = _round_up(max(m, 8), 8)
    per_row = 2 * (k * 2) + 2 * (n * 2) + n * 4        # 2x bf16 in, 2x bf16 out, f32 acc
    resident = 2 * (k * n * 2) + 2 * (n * 4)           # 2x bf16 weight, 2x f32 bias
    tm_budget = max(8, (budget_bytes - resident) // max(per_row, 1))
    tm_budget = max(8, min(tm_cap, (tm_budget // 8) * 8))
    n_tiles = max(2, _cdiv(mp, tm_budget))
    n_tiles += n_tiles % 2                              # even tile count (megacore split)
    tm = _round_up(_cdiv(mp, n_tiles), 8)
    return tm, n_tiles, tm * n_tiles


def _pad_lanes_default():
    # v5 chips: keep 128-aligned K/N (fully-fed MXU, unmasked stores).
    # v6e/v7x: HBM-bound -> skip padding, rely on full-dim BlockSpec exception.
    try:
        return "v5" in jax.devices()[0].device_kind.lower()
    except Exception:  # pragma: no cover - be safe on unusual backends
        return False


@functools.partial(jax.jit, static_argnames=("patch_size", "pad_lanes", "out_dtype"))
def _patch_embed_tokens(x, weight, bias, *, patch_size, pad_lanes, out_dtype):
    p = int(patch_size)
    B, C, H, W = x.shape
    E = weight.shape[0]

    # F.pad(x, (0, pad_w, 0, pad_h)) semantics: pad right/bottom only.
    pad_h = (-H) % p
    pad_w = (-W) % p

    # Cast first so the fused cast+pad+im2col pass writes bf16 (half the bytes).
    xb = x.astype(jnp.bfloat16)
    if pad_h or pad_w:
        xb = jnp.pad(xb, ((0, 0), (0, 0), (0, pad_h), (0, pad_w)))
    Hp, Wp = (H + pad_h) // p, (W + pad_w) // p

    # im2col for non-overlapping patches; column order (c, kh, kw) matches
    # conv_weight.reshape(E, C*p*p).  (See TODO(synk) at top of file.)
    xp = xb.reshape(B, C, Hp, p, Wp, p)
    xp = jnp.transpose(xp, (0, 2, 4, 1, 3, 5)).reshape(B * Hp * Wp, C * p * p)

    # NOTE: in a real model, flatten/cast the projection weight once at init;
    # here it is a tiny fused op under jit.
    w_flat = weight.reshape(E, C * p * p).T.astype(jnp.bfloat16)   # (K, N)
    b_row = bias.reshape(1, E).astype(jnp.float32)                 # (1, N)

    M, K = xp.shape
    N = E
    if pad_lanes:
        Kk, Nk = _round_up(K, 128), _round_up(N, 128)
    else:
        Kk, Nk = K, N

    TM, n_tiles, Mp = _pick_tiles(M, Kk, Nk)

    xp = jnp.pad(xp, ((0, Mp - M), (0, Kk - K)))
    w_flat = jnp.pad(w_flat, ((0, Kk - K), (0, Nk - N)))
    b_row = jnp.pad(b_row, ((0, 0), (0, Nk - N)))

    # Honest VMEM budget: dbl-buffered in/out tiles + dbl-buffered resident
    # weight/bias + f32 acc temp + slack.  Never request all of v7x's 64 MiB.
    need = (2 * TM * Kk * 2 + 2 * TM * Nk * 2 + TM * Nk * 4
            + 2 * Kk * Nk * 2 + 2 * Nk * 4)
    vmem_limit = int(min(48 * 1024 * 1024,
                         max(8 * 1024 * 1024, need + 4 * 1024 * 1024)))

    out = pl.pallas_call(
        _patch_embed_matmul_kernel,
        out_shape=jax.ShapeDtypeStruct((Mp, Nk), out_dtype),
        grid=(n_tiles,),
        in_specs=[
            pl.BlockSpec((TM, Kk), lambda i: (i, 0)),   # streamed patch rows
            pl.BlockSpec((Kk, Nk), lambda i: (0, 0)),   # resident weight
            pl.BlockSpec((1, Nk), lambda i: (0, 0)),    # resident bias
        ],
        out_specs=pl.BlockSpec((TM, Nk), lambda i: (i, 0)),
        compiler_params=pltpu.CompilerParams(
            dimension_semantics=("parallel",),
            vmem_limit_bytes=vmem_limit,
        ),
    )(xp, w_flat, b_row)

    tokens = out[:M, :N].reshape(B, Hp * Wp, E)
    # norm_layer=None -> nn.Identity(): no normalization applied.
    return tokens


def patch_embed_pallas(x, weight, bias, patch_size, *, pad_lanes=None,
                       out_dtype=jnp.bfloat16):
    """PatchEmbed_s forward.

    x:      (B, C, H, W) float32, NCHW (PyTorch layout).
    weight: (embed_dim, C, p, p) Conv2d weight (OIHW), bias: (embed_dim,).
    Returns (tokens, Hp, Wp); tokens: (B, Hp*Wp, embed_dim) in `out_dtype`
    (bf16 by default — f32 accumulation happens in-kernel)."""
    p = int(patch_size)
    if pad_lanes is None:
        pad_lanes = _pad_lanes_default()
    B, C, H, W = x.shape
    Hp, Wp = _cdiv(H, p), _cdiv(W, p)
    tokens = _patch_embed_tokens(x, weight, bias, patch_size=p,
                                 pad_lanes=bool(pad_lanes), out_dtype=out_dtype)
    return tokens, Hp, Wp


def _reference(x, weight, bias, patch_size):
    """Pure-JAX reference (same math, via lax.conv_general_dilated)."""
    p = patch_size
    B, C, H, W = x.shape
    pad_h = (-H) % p
    pad_w = (-W) % p
    if pad_h or pad_w:
        x = jnp.pad(x, ((0, 0), (0, 0), (0, pad_h), (0, pad_w)))
    y = jax.lax.conv_general_dilated(
        x, weight, window_strides=(p, p), padding="VALID",
        dimension_numbers=("NCHW", "OIHW", "NCHW"))
    y = y + bias.reshape(1, -1, 1, 1)
    B2, E, Hp, Wp = y.shape
    y = y.reshape(B2, E, Hp * Wp).transpose(0, 2, 1)
    return y, Hp, Wp


if __name__ == "__main__":
    base_key = jax.random.PRNGKey(0)

    def check(case_idx, B, C, H, W, patch_size, embed_dim):
        key = jax.random.fold_in(base_key, case_idx)
        kx, kw, kb = jax.random.split(key, 3)
        x = jax.random.normal(kx, (B, C, H, W), dtype=jnp.float32)
        weight = jax.random.normal(
            kw, (embed_dim, C, patch_size, patch_size), dtype=jnp.float32) * 0.05
        bias = jax.random.normal(kb, (embed_dim,), dtype=jnp.float32) * 0.05

        tokens, Hp, Wp = patch_embed_pallas(x, weight, bias, patch_size)
        tokens = jax.block_until_ready(tokens)

        # Reference on bf16-quantized inputs (kernel uses bf16 matmul inputs,
        # f32 accumulation, bf16 output) -> tolerance covers one bf16 rounding.
        xq = x.astype(jnp.bfloat16).astype(jnp.float32)
        wq = weight.astype(jnp.bfloat16).astype(jnp.float32)
        ref_tokens, ref_Hp, ref_Wp = _reference(xq, wq, bias, patch_size)

        assert (int(Hp), int(Wp)) == (int(ref_Hp), int(ref_Wp)), (Hp, Wp, ref_Hp, ref_Wp)
        assert tokens.shape == (B, Hp * Wp, embed_dim), tokens.shape
        out_f32 = tokens.astype(jnp.float32)
        err = float(jnp.max(jnp.abs(out_f32 - ref_tokens)))
        assert jnp.allclose(out_f32, ref_tokens, atol=2e-2, rtol=2e-2), err

    # Divisible spatial size (no-pad path) and a non-divisible one (pad path).
    check(0, B=2, C=3, H=16, W=16, patch_size=4, embed_dim=32)
    check(1, B=2, C=3, H=15, W=17, patch_size=4, embed_dim=32)

    print("KERNEL_OK")
</pallas_src>

<mosaic_0001>
module attributes {stable_mosaic.version = 11 : i64} {
  func.func @_patch_embed_matmul_kernel(%arg0: i32, %arg1: memref<16x48xbf16, #tpu.memory_space<vmem>>, %arg2: memref<48x32xbf16, #tpu.memory_space<vmem>>, %arg3: memref<1x32xf32, #tpu.memory_space<vmem>>, %arg4: memref<16x32xbf16, #tpu.memory_space<vmem>>) attributes {dimension_semantics = [#tpu.dimension_semantics<parallel>], iteration_bounds = array<i64: 2>, scalar_prefetch = 0 : i64, scratch_operands = 0 : i64, tpu.core_type = #tpu.core_type<tc>, window_params = [{transform_indices = @transform_0, window_bounds = array<i64: 16, 48>}, {pipeline_mode = #tpu.pipeline_mode<synchronous>, transform_indices = @transform_1, window_bounds = array<i64: 48, 32>}, {pipeline_mode = #tpu.pipeline_mode<synchronous>, transform_indices = @transform_2, window_bounds = array<i64: 1, 32>}, {transform_indices = @transform_3, window_bounds = array<i64: 16, 32>}]} {
    %c0 = arith.constant 0 : index
    %c0_0 = arith.constant 0 : index
    %0 = vector.load %arg1[%c0, %c0_0] : memref<16x48xbf16, #tpu.memory_space<vmem>>, vector<16x48xbf16>
    %c0_1 = arith.constant 0 : index
    %c0_2 = arith.constant 0 : index
    %1 = vector.load %arg2[%c0_1, %c0_2] : memref<48x32xbf16, #tpu.memory_space<vmem>>, vector<48x32xbf16>
    %cst = arith.constant dense<0.000000e+00> : vector<16x32xf32>
    %2 = tpu.matmul %0, %1, %cst {dimension_numbers = #tpu.dot_dimension_numbers<[1], [0], [0], [1], [0, 0, 1, 1], [], []>} : vector<16x48xbf16>, vector<48x32xbf16>, vector<16x32xf32> -> vector<16x32xf32>
    %c0_3 = arith.constant 0 : index
    %c0_4 = arith.constant 0 : index
    %3 = vector.load %arg3[%c0_3, %c0_4] : memref<1x32xf32, #tpu.memory_space<vmem>>, vector<1x32xf32>
    %4 = vector.broadcast %3 : vector<1x32xf32> to vector<16x32xf32>
    %5 = arith.addf %2, %4 : vector<16x32xf32>
    %6 = arith.truncf %5 : vector<16x32xf32> to vector<16x32xbf16>
    %c0_5 = arith.constant 0 : index
    %c0_6 = arith.constant 0 : index
    %7 = vector.load %arg4[%c0_5, %c0_6] : memref<16x32xbf16, #tpu.memory_space<vmem>>, vector<16x32xbf16>
    tpu.vector_store %arg4[%c0_5, %c0_6], %6 {strides = array<i32>} : memref<16x32xbf16, #tpu.memory_space<vmem>>, vector<16x32xbf16>,
    return
  }
  func.func @transform_0(%arg0: i32) -> (i32, i32) {
    %c0_i32 = arith.constant 0 : i32
    %c0_i32_0 = arith.constant 0 : i32
    return %arg0, %c0_i32 : i32, i32
  }
  func.func @transform_1(%arg0: i32) -> (i32, i32) {
    %c0_i32 = arith.constant 0 : i32
    %c0_i32_0 = arith.constant 0 : i32
    %c0_i32_1 = arith.constant 0 : i32
    return %c0_i32, %c0_i32_0 : i32, i32
  }
  func.func @transform_2(%arg0: i32) -> (i32, i32) {
    %c0_i32 = arith.constant 0 : i32
    %c0_i32_0 = arith.constant 0 : i32
    %c0_i32_1 = arith.constant 0 : i32
    return %c0_i32, %c0_i32_0 : i32, i32
  }
  func.func @transform_3(%arg0: i32) -> (i32, i32) {
    %c0_i32 = arith.constant 0 : i32
    %c0_i32_0 = arith.constant 0 : i32
    return %arg0, %c0_i32 : i32, i32
  }
}

</mosaic_0001>

<llo_original>
// kernel: _patch_embed_tokens.1
$region0: #{_patch_embed_tokens.1}
  #allocation0 [shape = 'u32[]', space=smem, size = 0x4, offset = 0x4, fixed_abs, tag = 'smem constant byte address 0x4 - core index']
  #allocation1 [shape = 'u32[144,128]{1,0:T(1,128)}', space=vmem, size = 0x12000, scoped, tag = 'internal scratch']
  %s0 = inlined_call_operand.vmem [shape: bf16[32,48], index: 0, kind: input, shape index: {}]
  %s1 = inlined_call_operand.vmem [shape: bf16[48,32], index: 1, kind: input, shape index: {}]
  %s2 = inlined_call_operand.vmem [shape: f32[1,32], index: 2, kind: input, shape index: {}]
  %s3 = inlined_call_operand.hbm [shape: bf16[32,32], index: 3, kind: output, shape index: {}]
  %s4 = sld [smem:[#allocation0]]
  $region45: #{_patch_embed_tokens.1} parent=0
    _
  %s6 = ssub.s32 1, %s4
  %s7 = scalar_select 0, %s6, %s4
  $region1: #{_patch_embed_tokens.1} parent=0
    #allocation2 [shape = 'u8[8192]{0}', space=vmem, size = 0x2000, scoped, tag = 'output window, operand 0']
    #allocation3 [shape = 's32[2]{0}', space=sflag, size = 0x8, scoped, tag = 'scoped memory for _patch_embed_tokens.1']
    %8 = vsyncpa [#allocation3], 0
    %s9 = scalar_lea.sflag [#allocation3], 1
    %10 = vsyncpa %s9, 0
    loop: start=0, step=1, limit=4
    $region2: #{_patch_embed_tokens.1} parent=1 // loop_pre_header
      _
    $region3: #{_patch_embed_tokens.1} parent=1 // loop_header
      %s12 = sphi 0, %s16
      %p13 = scmp.ge.s32.totalorder %s12, 4
      %s22 = sphi 0, %s24
      %s25 = sphi 0, %s22
      %s26 = sphi 0, %s25
      %s42 = sphi 0, %s26
      %s46 = sphi 0, %s46
      %s48 = sphi 0, %s46
      %s49 = sphi 0, %s48
      %s63 = sphi 0, %s49
      %s67 = sphi 0, %s67
      %s69 = sphi 0, %s67
      %s70 = sphi 0, %s69
      %s84 = sphi 0, %s70
      %s90 = sphi 0, %s92
      %s93 = sphi 0, %s90
      %s94 = sphi 0, %s93
      %s110 = sphi 0, %s94
    $region4: #{_patch_embed_tokens.1} parent=1 // loop_header_branch
      %15 = sbr.rel (%p13) target = $region8
    $region5: #{_patch_embed_tokens.1} parent=1 // loop_body
      %s17 = ssub.s32 %s12, 1
      %s18 = ssub.s32 %s12, 2
      %s19 = sadd.s32 %s12, 1
      %s20 = ssub.s32 %s12, %s19
      %p21 = scmp.eq.s32.totalorder %s20, 0
      %s23 = sadd.s32 %s22, 1
      %s24 = scalar_select %p21, %s22, %s23
      %p27 = pneg %p21
      %p28 = scmp.eq.s32.totalorder %s12, 1
      %p29 = por %p27, %p28
      %p30 = scmp.ne.s32.totalorder %s22, %s25
      %p31 = scmp.eq.s32.totalorder %s12, 0
      %p32 = por %p30, %p31
      %p33 = scmp.ne.s32.totalorder %s22, %s25
      %p34 = scmp.eq.s32.totalorder %s17, 1
      %p35 = por %p33, %p34
      %p36 = scmp.ne.s32.totalorder %s25, %s26
      %p37 = scmp.eq.s32.totalorder %s17, 0
      %p38 = por %p36, %p37
      %p39 = scmp.ne.s32.totalorder %s25, %s26
      %p40 = scmp.eq.s32.totalorder %s18, 1
      %p41 = por %p39, %p40
      %p43 = scmp.ne.s32.totalorder %s26, %s42
      %p44 = scmp.eq.s32.totalorder %s18, 0
      %p45 = por %p43, %p44
      %s47 = sadd.s32 %s46, 1
      %p50 = scmp.eq.s32.totalorder %s12, 1
      %p51 = scmp.ne.s32.totalorder %s46, %s48
      %p52 = scmp.eq.s32.totalorder %s12, 0
      %p53 = por %p51, %p52
      %p54 = scmp.ne.s32.totalorder %s46, %s48
      %p55 = scmp.eq.s32.totalorder %s17, 1
      %p56 = por %p54, %p55
      %p57 = scmp.ne.s32.totalorder %s48, %s49
      %p58 = scmp.eq.s32.totalorder %s17, 0
      %p59 = por %p57, %p58
      %p60 = scmp.ne.s32.totalorder %s48, %s49
      %p61 = scmp.eq.s32.totalorder %s18, 1
      %p62 = por %p60, %p61
      %p64 = scmp.ne.s32.totalorder %s49, %s63
      %p65 = scmp.eq.s32.totalorder %s18, 0
      %p66 = por %p64, %p65
      %s68 = sadd.s32 %s67, 1
      %p71 = scmp.eq.s32.totalorder %s12, 1
      %p72 = scmp.ne.s32.totalorder %s67, %s69
      %p73 = scmp.eq.s32.totalorder %s12, 0
      %p74 = por %p72, %p73
      %p75 = scmp.ne.s32.totalorder %s67, %s69
      %p76 = scmp.eq.s32.totalorder %s17, 1
      %p77 = por %p75, %p76
      %p78 = scmp.ne.s32.totalorder %s69, %s70
      %p79 = scmp.eq.s32.totalorder %s17, 0
      %p80 = por %p78, %p79
      %p81 = scmp.ne.s32.totalorder %s69, %s70
      %p82 = scmp.eq.s32.totalorder %s18, 1
      %p83 = por %p81, %p82
      %p85 = scmp.ne.s32.totalorder %s70, %s84
      %p86 = scmp.eq.s32.totalorder %s18, 0
      %p87 = por %p85, %p86
      %s88 = ssub.s32 %s12, %s19
      %p89 = scmp.eq.s32.totalorder %s88, 0
      %s91 = sadd.s32 %s90, 1
      %s92 = scalar_select %p89, %s90, %s91
      %p95 = pneg %p89
      %p96 = scmp.eq.s32.totalorder %s12, 1
      %p97 = por %p95, %p96
      %p98 = scmp.ne.s32.totalorder %s90, %s93
      %p99 = scmp.eq.s32.totalorder %s12, 0
      %p100 = por %p98, %p99
      %p101 = scmp.ne.s32.totalorder %s90, %s93
      %p102 = scmp.eq.s32.totalorder %s17, 1
      %p103 = por %p101, %p102
      %p104 = scmp.ne.s32.totalorder %s93, %s94
      %p105 = scmp.eq.s32.totalorder %s17, 0
      %p106 = por %p104, %p105
      %p107 = scmp.ne.s32.totalorder %s93, %s94
      %p108 = scmp.eq.s32.totalorder %s18, 1
      %p109 = por %p107, %p108
      %p111 = scmp.ne.s32.totalorder %s94, %s110
      %p112 = scmp.eq.s32.totalorder %s18, 0
      %p113 = por %p111, %p112
      %p114 = scmp.le.s32.totalorder 1, %s12
      %p115 = scmp.lt.s32.totalorder %s12, 3
      %p116 = pnand %p114, %p115
      %p117 = pneg %p116
      // Predicated region
      $region9: #{_patch_embed_tokens.1} parent=5 // pred_check
        _
      $region10: #{_patch_embed_tokens.1} parent=5 // pred_check_branch
        %119 = sbr.rel (%p116) target = $region12
      $region11: #{_patch_embed_tokens.1} parent=5 // pred_region
        %s120 = ssub.s32 %s12, 1
        // Predicated region
        $region13: #{_patch_embed_tokens.1} parent=11 // pred_check
          %p121 = pneg %p59
        $region14: #{_patch_embed_tokens.1} parent=11 // pred_check_branch
          %123 = sbr.rel (%p121) target = $region16
        $region15: #{_patch_embed_tokens.1} parent=11 // pred_region
          _
        $region16: #{_patch_embed_tokens.1} parent=11 // pred_fallthru
          _
        // Predicated region
        $region17: #{_patch_embed_tokens.1} parent=11 // pred_check
          %p124 = pneg %p80
        $region18: #{_patch_embed_tokens.1} parent=11 // pred_check_branch
          %126 = sbr.rel (%p124) target = $region20
        $region19: #{_patch_embed_tokens.1} parent=11 // pred_region
          _
        $region20: #{_patch_embed_tokens.1} parent=11 // pred_fallthru
          _
      $region12: #{_patch_embed_tokens.1} parent=5 // pred_fallthru
        _
      %p127 = scmp.lt.s32.totalorder %s12, 2
      // Predicated region
      $region21: #{_patch_embed_tokens.1} parent=5 // pred_check
        %p128 = pneg %p127
      $region22: #{_patch_embed_tokens.1} parent=5 // pred_check_branch
        %130 = sbr.rel (%p128) target = $region24
      $region23: #{_patch_embed_tokens.1} parent=5 // pred_region
        // Predicated region
        $region25: #{_patch_embed_tokens.1} parent=23 // pred_check
          %p131 = pneg %p32
        $region26: #{_patch_embed_tokens.1} parent=23 // pred_check_branch
          %133 = sbr.rel (%p131) target = $region28
        $region27: #{_patch_embed_tokens.1} parent=23 // pred_region
          %s134 = smul.u32 2, %s12
          %p135 = scmp.lt.s32.totalorder %s134, 3
          %s136 = scalar_select %p135, %s134, 3
          %s137 = smul.addr %s136, 4
          %s138 = scalar_lea.vmem %s0, %s137
          %s139 = smul.u32 2, %s12
        $region28: #{_patch_embed_tokens.1} parent=23 // pred_fallthru
          _
      $region24: #{_patch_embed_tokens.1} parent=5 // pred_fallthru
        _
      %p140 = scmp.le.s32.totalorder 1, %s12
      %p141 = scmp.lt.s32.totalorder %s12, 3
      %p142 = pnand %p140, %p141
      %p143 = pneg %p142
      // Predicated region
      $region29: #{_patch_embed_tokens.1} parent=5 // pred_check
        _
      $region30: #{_patch_embed_tokens.1} parent=5 // pred_check_branch
        %145 = sbr.rel (%p142) target = $region32
      $region31: #{_patch_embed_tokens.1} parent=5 // pred_region
        %s146 = ssub.s32 %s12, 1
        %s147 = smul.u32 2, %s17
        %p148 = scmp.lt.s32.totalorder %s147, 3
        %s149 = scalar_select %p148, %s147, 3
        %s150 = smul.addr %s149, 4
        %s151 = scalar_lea.vmem %s0, %s150
        %p152 = pneg %p38
        %p153 = pneg %p35
        %p154 = pneg %p59
        %p155 = pneg %p56
        %p156 = pneg %p80
        %p157 = pneg %p77
        %p158 = pneg %p106
        %p159 = pneg %p103
        %s160 = sand.u32 %s93, 1
        %s161 = scalar_lea.sflag [#allocation3], %s160
        %s162 = sand.u32 %s93, 1
        %s163 = smul.addr %s162, 8
        %s164 = scalar_lea.vmem [#allocation2], %s163
        %s165 = smul.u32 2, %s17
        %p166 = scmp.lt.s32.totalorder %s165, 3
        %s167 = scalar_select %p166, %s165, 3
        %s168 = smul.addr %s167, 4
        %s169 = scalar_lea.vmem %s0, %s168
        %s170 = smul.u32 2, %s17
        %s171 = smul.u32 2, %s17
        %v173 = vld [vmem:[%s169] sm:$0xf]
        %v174 = vld [vmem:[%s169 + $0x4] sm:$0xf]
        %v175 = vld [vmem:[%s1] sm:$0xf]
        %v176 = vld [vmem:[%s1 + $0x4] sm:$0xf]
        %v177 = vld [vmem:[%s1 + $0x8] sm:$0xf]
        %v178 = vld [vmem:[%s1 + $0xc] sm:$0xf]
        %v179 = vld [vmem:[%s1 + $0x10] sm:$0xf]
        %v180 = vld [vmem:[%s1 + $0x14] sm:$0xf]
        %v181 = vld [vmem:[%s2] sm:$0x1]
        %v183 = vlaneseq
        %v184 = vshrl.u32 %v183, 7
        %v185 = vsub.s32 0, %v184
        %v186 = vrot.slane %v181, %v185
        %v190 = vunpack.c.l.b16 %v173
        %v191 = vunpack.c.l.b16 %v174
        %v192 = vpack.c.b16 %v191, %v190
        %v199 = vunpack.c.l.b16 %v175
        %v200 = vunpack.c.l.b16 %v176
        %v201 = vunpack.c.l.b16 %v177
        %v202 = vunpack.c.l.b16 %v178
        %v203 = vunpack.c.l.b16 %v179
        %v204 = vunpack.c.l.b16 %v180
        %v205 = vpack.c.b16 %v200, %v199
        %v206 = vpack.c.b16 %v202, %v201
        %v207 = vpack.c.b16 %v204, %v203
        %vm211 = vcmask 392192
        %v213 = vsel %vm211, %v192, 0
        %215 = vmatprep.subr.bf16.mxu0 0
        %216 = vmatpush1.bf16.msra.mxu0 0
        %217 = vmatprep.subr.bf16.mxu0 0
        %218 = vmatpush1.bf16.msra.mxu0 0
        %219 = vmatprep.subr.bf16.mxu0 0
        %220 = vmatpush1.bf16.msra.mxu0 0
        %221 = vmatprep.subr.bf16.mxu0 0
        %222 = vmatpush1.bf16.msra.mxu0 0
        %223 = vmatprep.subr.bf16.mxu0 0
        %224 = vmatpush1.bf16.msra.mxu0 0
        %225 = vmatprep.subr.bf16.mxu0 0
        %226 = vmatpush1.bf16.msra.mxu0 %v207
        %227 = vmatprep.subr.bf16.mxu0 0
        %228 = vmatpush1.bf16.msra.mxu0 %v206
        %229 = vmatprep.subr.bf16.mxu0 0
        %230 = vmatpush1.bf16.msra.mxu0 %v205
        %231 = vmatprep.subr.bf16.mxu0 0
        %232 = vmatpush2.bf16.msra.mxu0 0
        %233 = vmatprep.subr.bf16.mxu0 0
        %234 = vmatpush2.bf16.msra.mxu0 0
        %235 = vmatprep.subr.bf16.mxu0 0
        %236 = vmatpush2.bf16.msra.mxu0 0
        %237 = vmatprep.subr.bf16.mxu0 0
        %238 = vmatpush2.bf16.msra.mxu0 0
        %239 = vmatprep.subr.bf16.mxu0 0
        %240 = vmatpush2.bf16.msra.mxu0 0
        %241 = vmatprep.subr.bf16.mxu0 0
        %242 = vmatpush2.bf16.msra.mxu0 0
        %243 = vmatprep.subr.bf16.mxu0 0
        %244 = vmatpush2.bf16.msra.mxu0 0
        %245 = vmatprep.subr.bf16.mxu0 0
        %246 = vmatpush2.bf16.msra.mxu0 0
        %247 = vmatprep.mubr.bf16.mxu0 0
        %248 = vmatmul.mubr.bf16.gmra.mxu0 %v213
        %v249 = vpop.f32.mrf.mxu0
        %v250 = vadd.f32 %v186, %v249
        %v251 = vpop.f32.mrf.mxu0
        %v252 = vpop.f32.mrf.mxu0
        %v253 = vadd.f32 %v186, %v252
        %v254 = vpop.f32.mrf.mxu0
        %255 = vdwg.mxu0
        %v256 = vpack.c.bf16 %v253, %v250
        %v258 = vunpack.c.l.b16 %v256
        %v259 = vunpack.c.h.b16 %v256
        %v260 = vpack.c.b16 %v258, %v258
        %v261 = vpack.c.b16 %v259, %v259
        %vm264 = vcmask 257024
        %265 = vst.msk [vmem:[%s164] sm:$0xf] %vm264, %v260
        %266 = vst.msk [vmem:[%s164 + $0x4] sm:$0xf] %vm264, %v261
        %s267 = sand.u32 %s93, 1
        %s268 = scalar_lea.sflag [#allocation3], %s267
        %s269 = sand.u32 %s93, 1
        %s270 = smul.addr %s269, 8
        %s271 = scalar_lea.vmem [#allocation2], %s270
        // Predicated region
        $region33: #{_patch_embed_tokens.1} parent=31 // pred_check
          %p272 = pneg %p103
        $region34: #{_patch_embed_tokens.1} parent=31 // pred_check_branch
          %274 = sbr.rel (%p272) target = $region36
        $region35: #{_patch_embed_tokens.1} parent=31 // pred_region
          %s275 = smul.u32 2, %s17
          %s277 = ssub.s32 128, 128
          %278 = vsyncadd %s268, %s277
          %s279 = smul.addr %s275, 64
          %s280 = scalar_lea.hbm %s3, %s279
          %s281 = sshll.u32 %s271, 4
          %s282 = int_to_ptr.vmem [resolvable:$true] %s281
          %287 = dma.vmem_to_hbm [thread:$0]  %s282, 128, %s280, %s268, 64, 64, 4
        $region36: #{_patch_embed_tokens.1} parent=31 // pred_fallthru
          _
      $region32: #{_patch_embed_tokens.1} parent=5 // pred_fallthru
        _
      %p288 = scmp.le.s32.totalorder 2, %s12
      // Predicated region
      $region37: #{_patch_embed_tokens.1} parent=5 // pred_check
        %p289 = pneg %p288
      $region38: #{_patch_embed_tokens.1} parent=5 // pred_check_branch
        %291 = sbr.rel (%p289) target = $region40
      $region39: #{_patch_embed_tokens.1} parent=5 // pred_region
        %s292 = ssub.s32 %s12, 2
        // Predicated region
        $region41: #{_patch_embed_tokens.1} parent=39 // pred_check
          %p293 = pneg %p109
        $region42: #{_patch_embed_tokens.1} parent=39 // pred_check_branch
          %295 = sbr.rel (%p293) target = $region44
        $region43: #{_patch_embed_tokens.1} parent=39 // pred_region
          %s296 = sand.u32 %s94, 1
          %s297 = scalar_lea.sflag [#allocation3], %s296
          %s298 = sand.u32 %s94, 1
          %s299 = smul.addr %s298, 8
          %s300 = scalar_lea.vmem [#allocation2], %s299
          %301 = dma.done %s297, 128
        $region44: #{_patch_embed_tokens.1} parent=39 // pred_fallthru
          _
      $region40: #{_patch_embed_tokens.1} parent=5 // pred_fallthru
        _
    $region6: #{_patch_embed_tokens.1} parent=1 // loop_footer
      %s16 = sadd.s32 1, %s12
    $region7: #{_patch_embed_tokens.1} parent=1 // loop_footer_branch
      %11 = sbr.rel target = $region3
    $region8: #{_patch_embed_tokens.1} parent=1 // loop_exit
      _
    %302 = vsyncpa [#allocation3], 1
    %s303 = scalar_lea.sflag [#allocation3], 1
    %304 = vsyncpa %s303, 1

</llo_original>
